<compile_context>
chip_gen: v6e
topology: v6e:2x2x1
jax: 0.10.0
libtpu: 0.0.40
codegen_flags: <defaults>
</compile_context>

<pallas_src>
import functools

import jax
import jax.numpy as jnp
from jax import lax
from jax.experimental import pallas as pl
from jax.experimental.pallas import tpu as pltpu


def _cam_kernel(gamma_ref, xr_ref, xf_ref, o_ref):
    # xr_ref: (1, R, Np)  query-row tile of X (this grid step's output rows)
    # xf_ref: (1, C, Np)  full X for this batch element (resident across row tiles)
    x_rows = xr_ref[0]                      # (R, Np), input dtype
    x_full = xf_ref[0]                      # (C, Np), input dtype

    # energy rows = X_rows @ X^T without materializing the transpose:
    # contract last dim of both operands -> (R, C), f32 accumulation on the MXU.
    energy = lax.dot_general(
        x_rows, x_full,
        dimension_numbers=(((1,), (1,)), ((), ())),
        preferred_element_type=jnp.float32,
    )

    # softmax(max(energy) - energy) == softmax(-energy)
    #   == exp(min(energy) - energy) / row_sum  (single cross-lane reduce).
    m = jnp.min(energy, axis=-1, keepdims=True)          # (R, 1)
    ez = jnp.exp(m - energy)                              # (R, C), f32
    denom = jnp.sum(ez, axis=-1, keepdims=True)           # (R, 1)

    # EUP reciprocal + one Newton-Raphson refinement (keeps full f32 accuracy).
    inv = pl.reciprocal(denom, approx=True)
    inv = inv * (2.0 - denom * inv)

    # Deferred normalization: (unnormalized attention) @ X, then scale rows.
    out = jnp.dot(ez.astype(x_full.dtype), x_full,
                  preferred_element_type=jnp.float32)     # (R, Np), f32

    gamma = gamma_ref[0]
    o_ref[0] = (gamma * (out * inv) + x_rows.astype(jnp.float32)).astype(o_ref.dtype)


def _pick_row_tile(C):
    """Row-tile size for the channel axis: multiple of 8 dividing C, or full C."""
    if C <= 256:
        return C
    for r in (256, 128, 64, 32, 16, 8):
        if C % r == 0:
            return r
    return C  # fall back to a single full-C tile (still a legal block shape)


@functools.partial(jax.jit, static_argnames=())
def cam_module_forward(x, gamma):
    """x: (B, C, H, W) float array, gamma: shape (1,) float array."""
    B, C, H, W = x.shape
    N = H * W
    Np = ((N + 127) // 128) * 128            # lane-dense last dim
    x_flat = x.reshape(B, C, N)
    if Np != N:
        x_flat = jnp.pad(x_flat, ((0, 0), (0, 0), (0, Np - N)))

    R = _pick_row_tile(C)
    n_row_tiles = C // R if C % R == 0 else 1
    if n_row_tiles == 1:
        R = C

    itemsize = jnp.dtype(x.dtype).itemsize
    # resident X (double-buffered) + row-tile in/out (double-buffered) + f32 temps
    vmem_est = itemsize * (2 * C * Np + 4 * R * Np) + 4 * (2 * R * C + 2 * R * Np)
    vmem_limit = int(min(max(2 * vmem_est, 32 * 1024 * 1024), 120 * 1024 * 1024))

    cost = pl.CostEstimate(
        flops=4 * B * C * C * Np,                       # two (R,C)x(C,Np)-class matmuls
        transcendentals=B * C * C,                      # exp over energy
        bytes_accessed=itemsize * B * C * Np * (n_row_tiles + 2),
    )

    out_flat = pl.pallas_call(
        _cam_kernel,
        out_shape=jax.ShapeDtypeStruct((B, C, Np), x.dtype),
        grid_spec=pltpu.PrefetchScalarGridSpec(
            num_scalar_prefetch=0,
            grid=(B, n_row_tiles),
            in_specs=[
                pl.BlockSpec(memory_space=pltpu.SMEM),                 # gamma scalar
                pl.BlockSpec((1, R, Np), lambda b, r: (b, r, 0)),      # query-row tile
                pl.BlockSpec((1, C, Np), lambda b, r: (b, 0, 0)),      # full X, resident
            ],
            out_specs=pl.BlockSpec((1, R, Np), lambda b, r: (b, r, 0)),
        ),
        compiler_params=pltpu.CompilerParams(
            dimension_semantics=("parallel", "parallel"),
            vmem_limit_bytes=vmem_limit,
        ),
        cost_estimate=cost,
    )(gamma, x_flat, x_flat)

    out = out_flat[..., :N] if Np != N else out_flat
    return out.reshape(B, C, H, W)


def _cam_reference(x, gamma):
    B, C, H, W = x.shape
    xf = x.reshape(B, C, H * W).astype(jnp.float32)
    energy = jnp.einsum("bcn,bdn->bcd", xf, xf)
    energy_new = jnp.max(energy, axis=-1, keepdims=True) - energy
    attention = jax.nn.softmax(energy_new, axis=-1)
    out = jnp.einsum("bcd,bdn->bcn", attention, xf)
    out = out.reshape(B, C, H, W)
    return (gamma[0] * out + x.astype(jnp.float32)).astype(x.dtype)


if __name__ == "__main__":
    key = jax.random.PRNGKey(0)

    # gamma initialized to zeros(1) as in the PyTorch module; also test nonzero
    # so the attention path is exercised.
    gamma_zero = jnp.zeros((1,), dtype=jnp.float32)
    gamma_test = jnp.array([0.5], dtype=jnp.float32)

    # Case 1: N already a multiple of 128.
    B, C, H, W = 2, 4, 16, 16
    x = jax.random.normal(key, (B, C, H, W), dtype=jnp.float32)
    out0 = jax.block_until_ready(cam_module_forward(x, gamma_zero))
    out1 = jax.block_until_ready(cam_module_forward(x, gamma_test))
    assert jnp.allclose(out0, _cam_reference(x, gamma_zero), atol=1e-4, rtol=1e-4)
    assert jnp.allclose(out1, _cam_reference(x, gamma_test), atol=1e-4, rtol=1e-4)

    # Case 2: N not a multiple of 128 (exercises the lane-padding path).
    key2 = jax.random.PRNGKey(1)
    x2 = jax.random.normal(key2, (2, 4, 10, 10), dtype=jnp.float32)
    out2 = jax.block_until_ready(cam_module_forward(x2, gamma_test))
    assert jnp.allclose(out2, _cam_reference(x2, gamma_test), atol=1e-4, rtol=1e-4)

    print("KERNEL_OK")
</pallas_src>

<mosaic_0001>
module attributes {stable_mosaic.version = 11 : i64} {
  func.func @_cam_kernel(%arg0: i32, %arg1: i32, %arg2: memref<1xf32, #tpu.memory_space<smem>>, %arg3: memref<1x4x256xf32, #tpu.memory_space<vmem>>, %arg4: memref<1x4x256xf32, #tpu.memory_space<vmem>>, %arg5: memref<1x4x256xf32, #tpu.memory_space<vmem>>) attributes {dimension_semantics = [#tpu.dimension_semantics<parallel>, #tpu.dimension_semantics<parallel>], iteration_bounds = array<i64: 2, 1>, scalar_prefetch = 0 : i64, scratch_operands = 0 : i64, tpu.core_type = #tpu.core_type<tc>, window_params = [{transform_indices = @transform_0, window_bounds = array<i64: 1>}, {transform_indices = @transform_1, window_bounds = array<i64: 1, 4, 256>}, {transform_indices = @transform_2, window_bounds = array<i64: 1, 4, 256>}, {transform_indices = @transform_3, window_bounds = array<i64: 1, 4, 256>}]} {
    %c0 = arith.constant 0 : index
    %c0_0 = arith.constant 0 : index
    %c0_1 = arith.constant 0 : index
    %0 = vector.load %arg3[%c0, %c0_0, %c0_1] : memref<1x4x256xf32, #tpu.memory_space<vmem>>, vector<1x4x256xf32>
    %1 = vector.shape_cast %0 : vector<1x4x256xf32> to vector<4x256xf32>
    %c0_2 = arith.constant 0 : index
    %c0_3 = arith.constant 0 : index
    %c0_4 = arith.constant 0 : index
    %2 = vector.load %arg4[%c0_2, %c0_3, %c0_4] : memref<1x4x256xf32, #tpu.memory_space<vmem>>, vector<1x4x256xf32>
    %3 = vector.shape_cast %2 : vector<1x4x256xf32> to vector<4x256xf32>
    %cst = arith.constant dense<0.000000e+00> : vector<4x4xf32>
    %4 = tpu.matmul %1, %3, %cst {dimension_numbers = #tpu.dot_dimension_numbers<[1], [1], [0], [0], [0, 0, 1, 0], [], []>} : vector<4x256xf32>, vector<4x256xf32>, vector<4x4xf32> -> vector<4x4xf32>
    %cst_5 = arith.constant dense<0x7F800000> : vector<4xf32>
    %5 = vector.multi_reduction <minimumf>, %4, %cst_5 [1] : vector<4x4xf32> to vector<4xf32>
    %6 = vector.shape_cast %5 : vector<4xf32> to vector<4x1xf32>
    %7 = vector.broadcast %6 : vector<4x1xf32> to vector<4x4xf32>
    %8 = arith.subf %7, %4 : vector<4x4xf32>
    %9 = math.exp %8 : vector<4x4xf32>
    %cst_6 = arith.constant dense<0.000000e+00> : vector<4xf32>
    %10 = vector.multi_reduction <add>, %9, %cst_6 [1] : vector<4x4xf32> to vector<4xf32>
    %11 = vector.shape_cast %10 : vector<4xf32> to vector<4x1xf32>
    %12 = tpu.reciprocal %11 {approx = true} : vector<4x1xf32> -> vector<4x1xf32>
    %13 = arith.mulf %11, %12 : vector<4x1xf32>
    %cst_7 = arith.constant 2.000000e+00 : f32
    %14 = vector.broadcast %cst_7 : f32 to vector<4x1xf32>
    %15 = arith.subf %14, %13 : vector<4x1xf32>
    %16 = arith.mulf %12, %15 : vector<4x1xf32>
    %cst_8 = arith.constant dense<0.000000e+00> : vector<4x256xf32>
    %17 = tpu.matmul %9, %3, %cst_8 {dimension_numbers = #tpu.dot_dimension_numbers<[1], [0], [0], [1], [0, 0, 1, 1], [], []>} : vector<4x4xf32>, vector<4x256xf32>, vector<4x256xf32> -> vector<4x256xf32>
    %c0_9 = arith.constant 0 : index
    %18 = memref.load %arg2[%c0_9] : memref<1xf32, #tpu.memory_space<smem>>
    %19 = vector.broadcast %16 : vector<4x1xf32> to vector<4x256xf32>
    %20 = arith.mulf %17, %19 : vector<4x256xf32>
    %21 = vector.broadcast %18 : f32 to vector<4x256xf32>
    %22 = arith.mulf %21, %20 : vector<4x256xf32>
    %23 = arith.addf %22, %1 : vector<4x256xf32>
    %c0_10 = arith.constant 0 : index
    %c0_11 = arith.constant 0 : index
    %c0_12 = arith.constant 0 : index
    %24 = vector.load %arg5[%c0_10, %c0_11, %c0_12] : memref<1x4x256xf32, #tpu.memory_space<vmem>>, vector<1x4x256xf32>
    %25 = vector.shape_cast %24 : vector<1x4x256xf32> to vector<4x256xf32>
    %26 = vector.shape_cast %23 : vector<4x256xf32> to vector<1x4x256xf32>
    tpu.vector_store %arg5[%c0_10, %c0_11, %c0_12], %26 {strides = array<i32>} : memref<1x4x256xf32, #tpu.memory_space<vmem>>, vector<1x4x256xf32>,
    return
  }
  func.func @transform_0(%arg0: i32, %arg1: i32) -> i32 {
    %c0_i32 = arith.constant 0 : i32
    %c0_i32_0 = arith.constant 0 : i32
    return %c0_i32 : i32
  }
  func.func @transform_1(%arg0: i32, %arg1: i32) -> (i32, i32, i32) {
    %c0_i32 = arith.constant 0 : i32
    %c0_i32_0 = arith.constant 0 : i32
    return %arg0, %arg1, %c0_i32 : i32, i32, i32
  }
  func.func @transform_2(%arg0: i32, %arg1: i32) -> (i32, i32, i32) {
    %c0_i32 = arith.constant 0 : i32
    %c0_i32_0 = arith.constant 0 : i32
    %c0_i32_1 = arith.constant 0 : i32
    return %arg0, %c0_i32, %c0_i32_0 : i32, i32, i32
  }
  func.func @transform_3(%arg0: i32, %arg1: i32) -> (i32, i32, i32) {
    %c0_i32 = arith.constant 0 : i32
    %c0_i32_0 = arith.constant 0 : i32
    return %arg0, %arg1, %c0_i32 : i32, i32, i32
  }
}

</mosaic_0001>

<llo_original>
// kernel: cam_module_forward.1
$region0: #{cam_module_forward.1}
  #allocation0 [shape = 'u32[]', space=smem, size = 0x4, offset = 0x4, fixed_abs, tag = 'smem constant byte address 0x4 - core index']
  #allocation1 [shape = 'u32[144,128]{1,0:T(1,128)}', space=vmem, size = 0x12000, scoped, tag = 'internal scratch']
  #allocation2 [shape = 'f32[1]{0:T(128)S(6)}', space=smem, size = 0x200, scoped, tag = 'scoped memory for cam_module_forward.1']
  %s0 = inlined_call_operand.<no memory space> [shape: f32[1], index: 0, kind: input, shape index: {}]
  %s1 = inlined_call_operand.vmem [shape: f32[2,4,256], index: 1, kind: input, shape index: {}, may-alias: {1,2}]
  %s2 = inlined_call_operand.vmem [shape: f32[2,4,256], index: 2, kind: input, shape index: {}, may-alias: {1,2}]
  %s3 = inlined_call_operand.vmem [shape: f32[2,4,256], index: 3, kind: output, shape index: {}]
  %s4 = sld [smem:[#allocation0]]
  $region45: #{cam_module_forward.1} parent=0
    _
  %s6 = ssub.s32 1, %s4
  %s7 = scalar_select 0, %s6, %s4
  %8 = sst [smem:[#allocation2]] %s0
  loop: start=0, step=1, limit=4
  $region2: #{cam_module_forward.1} parent=0 // loop_pre_header
    _
  $region3: #{cam_module_forward.1} parent=0 // loop_header
    %s10 = sphi 0, %s14
    %p11 = scmp.ge.s32.totalorder %s10, 4
    %s17 = sphi 0, %s29
    %s18 = sphi 0, %s25
    %s19 = sphi 0, %s17
    %s20 = sphi 0, %s18
    %s21 = sphi 0, %s19
    %s22 = sphi 0, %s20
    %s30 = sphi 0, %s30
    %s32 = sphi 0, %s30
    %s33 = sphi 0, %s32
    %s47 = sphi 0, %s33
    %s55 = sphi 0, %s57
    %s58 = sphi 0, %s55
    %s59 = sphi 0, %s58
    %s75 = sphi 0, %s59
    %s81 = sphi 0, %s83
    %s84 = sphi 0, %s81
    %s85 = sphi 0, %s84
    %s101 = sphi 0, %s85
    %s109 = sphi 0, %s111
    %s112 = sphi 0, %s109
    %s113 = sphi 0, %s112
    %s129 = sphi 0, %s113
  $region4: #{cam_module_forward.1} parent=0 // loop_header_branch
    %13 = sbr.rel (%p11) target = $region8
  $region5: #{cam_module_forward.1} parent=0 // loop_body
    %s15 = ssub.s32 %s10, 1
    %s16 = ssub.s32 %s10, 2
    %s23 = sadd.s32 1, %s18
    %p24 = scmp.ge.s32.totalorder %s23, 1
    %s25 = scalar_select %p24, 0, %s23
    %s26 = sadd.s32 1, %s17
    %s27 = scalar_select %p24, %s26, %s17
    %p28 = scmp.ge.s32.totalorder %s27, 2
    %s29 = scalar_select %p28, 0, %s27
    %s31 = sadd.s32 %s30, 1
    %p34 = scmp.eq.s32.totalorder %s10, 1
    %p35 = scmp.ne.s32.totalorder %s30, %s32
    %p36 = scmp.eq.s32.totalorder %s10, 0
    %p37 = por %p35, %p36
    %p38 = scmp.ne.s32.totalorder %s30, %s32
    %p39 = scmp.eq.s32.totalorder %s15, 1
    %p40 = por %p38, %p39
    %p41 = scmp.ne.s32.totalorder %s32, %s33
    %p42 = scmp.eq.s32.totalorder %s15, 0
    %p43 = por %p41, %p42
    %p44 = scmp.ne.s32.totalorder %s32, %s33
    %p45 = scmp.eq.s32.totalorder %s16, 1
    %p46 = por %p44, %p45
    %p48 = scmp.ne.s32.totalorder %s33, %s47
    %p49 = scmp.eq.s32.totalorder %s16, 0
    %p50 = por %p48, %p49
    %s51 = ssub.s32 %s17, %s29
    %s52 = ssub.s32 %s18, %s25
    %s53 = sor.u32 %s51, %s52
    %p54 = scmp.eq.s32.totalorder %s53, 0
    %s56 = sadd.s32 %s55, 1
    %s57 = scalar_select %p54, %s55, %s56
    %p60 = pneg %p54
    %p61 = scmp.eq.s32.totalorder %s10, 1
    %p62 = por %p60, %p61
    %p63 = scmp.ne.s32.totalorder %s55, %s58
    %p64 = scmp.eq.s32.totalorder %s10, 0
    %p65 = por %p63, %p64
    %p66 = scmp.ne.s32.totalorder %s55, %s58
    %p67 = scmp.eq.s32.totalorder %s15, 1
    %p68 = por %p66, %p67
    %p69 = scmp.ne.s32.totalorder %s58, %s59
    %p70 = scmp.eq.s32.totalorder %s15, 0
    %p71 = por %p69, %p70
    %p72 = scmp.ne.s32.totalorder %s58, %s59
    %p73 = scmp.eq.s32.totalorder %s16, 1
    %p74 = por %p72, %p73
    %p76 = scmp.ne.s32.totalorder %s59, %s75
    %p77 = scmp.eq.s32.totalorder %s16, 0
    %p78 = por %p76, %p77
    %s79 = ssub.s32 %s17, %s29
    %p80 = scmp.eq.s32.totalorder %s79, 0
    %s82 = sadd.s32 %s81, 1
    %s83 = scalar_select %p80, %s81, %s82
    %p86 = pneg %p80
    %p87 = scmp.eq.s32.totalorder %s10, 1
    %p88 = por %p86, %p87
    %p89 = scmp.ne.s32.totalorder %s81, %s84
    %p90 = scmp.eq.s32.totalorder %s10, 0
    %p91 = por %p89, %p90
    %p92 = scmp.ne.s32.totalorder %s81, %s84
    %p93 = scmp.eq.s32.totalorder %s15, 1
    %p94 = por %p92, %p93
    %p95 = scmp.ne.s32.totalorder %s84, %s85
    %p96 = scmp.eq.s32.totalorder %s15, 0
    %p97 = por %p95, %p96
    %p98 = scmp.ne.s32.totalorder %s84, %s85
    %p99 = scmp.eq.s32.totalorder %s16, 1
    %p100 = por %p98, %p99
    %p102 = scmp.ne.s32.totalorder %s85, %s101
    %p103 = scmp.eq.s32.totalorder %s16, 0
    %p104 = por %p102, %p103
    %s105 = ssub.s32 %s17, %s29
    %s106 = ssub.s32 %s18, %s25
    %s107 = sor.u32 %s105, %s106
    %p108 = scmp.eq.s32.totalorder %s107, 0
    %s110 = sadd.s32 %s109, 1
    %s111 = scalar_select %p108, %s109, %s110
    %p114 = pneg %p108
    %p115 = scmp.eq.s32.totalorder %s10, 1
    %p116 = por %p114, %p115
    %p117 = scmp.ne.s32.totalorder %s109, %s112
    %p118 = scmp.eq.s32.totalorder %s10, 0
    %p119 = por %p117, %p118
    %p120 = scmp.ne.s32.totalorder %s109, %s112
    %p121 = scmp.eq.s32.totalorder %s15, 1
    %p122 = por %p120, %p121
    %p123 = scmp.ne.s32.totalorder %s112, %s113
    %p124 = scmp.eq.s32.totalorder %s15, 0
    %p125 = por %p123, %p124
    %p126 = scmp.ne.s32.totalorder %s112, %s113
    %p127 = scmp.eq.s32.totalorder %s16, 1
    %p128 = por %p126, %p127
    %p130 = scmp.ne.s32.totalorder %s113, %s129
    %p131 = scmp.eq.s32.totalorder %s16, 0
    %p132 = por %p130, %p131
    %p133 = scmp.le.s32.totalorder 1, %s10
    %p134 = scmp.lt.s32.totalorder %s10, 3
    %p135 = pnand %p133, %p134
    %p136 = pneg %p135
    // Predicated region
    $region9: #{cam_module_forward.1} parent=5 // pred_check
      _
    $region10: #{cam_module_forward.1} parent=5 // pred_check_branch
      %138 = sbr.rel (%p135) target = $region12
    $region11: #{cam_module_forward.1} parent=5 // pred_region
      %s139 = ssub.s32 %s10, 1
      // Predicated region
      $region13: #{cam_module_forward.1} parent=11 // pred_check
        %p140 = pneg %p43
      $region14: #{cam_module_forward.1} parent=11 // pred_check_branch
        %142 = sbr.rel (%p140) target = $region16
      $region15: #{cam_module_forward.1} parent=11 // pred_region
        _
      $region16: #{cam_module_forward.1} parent=11 // pred_fallthru
        _
    $region12: #{cam_module_forward.1} parent=5 // pred_fallthru
      _
    %p143 = scmp.lt.s32.totalorder %s10, 2
    // Predicated region
    $region17: #{cam_module_forward.1} parent=5 // pred_check
      %p144 = pneg %p143
    $region18: #{cam_module_forward.1} parent=5 // pred_check_branch
      %146 = sbr.rel (%p144) target = $region20
    $region19: #{cam_module_forward.1} parent=5 // pred_region
      // Predicated region
      $region21: #{cam_module_forward.1} parent=19 // pred_check
        %p147 = pneg %p65
      $region22: #{cam_module_forward.1} parent=19 // pred_check_branch
        %149 = sbr.rel (%p147) target = $region24
      $region23: #{cam_module_forward.1} parent=19 // pred_region
        %p150 = scmp.lt.s32.totalorder %s17, 1
        %s151 = scalar_select %p150, %s17, 1
        %p152 = scmp.lt.s32.totalorder %s18, 0
        %s153 = scalar_select %p152, %s18, 0
        %s154 = smul.addr %s153, 2
        %s155 = smul.addr %s151, 2
        %s156 = sadd.s32 %s154, %s155
        %s157 = smul.addr %s156, 4
        %s158 = scalar_lea.vmem %s1, %s157
      $region24: #{cam_module_forward.1} parent=19 // pred_fallthru
        _
      // Predicated region
      $region25: #{cam_module_forward.1} parent=19 // pred_check
        %p159 = pneg %p91
      $region26: #{cam_module_forward.1} parent=19 // pred_check_branch
        %161 = sbr.rel (%p159) target = $region28
      $region27: #{cam_module_forward.1} parent=19 // pred_region
        %p162 = scmp.lt.s32.totalorder %s17, 1
        %s163 = scalar_select %p162, %s17, 1
        %s164 = smul.addr %s163, 2
        %s165 = smul.addr %s164, 4
        %s166 = scalar_lea.vmem %s2, %s165
      $region28: #{cam_module_forward.1} parent=19 // pred_fallthru
        _
    $region20: #{cam_module_forward.1} parent=5 // pred_fallthru
      _
    %p167 = scmp.le.s32.totalorder 1, %s10
    %p168 = scmp.lt.s32.totalorder %s10, 3
    %p169 = pnand %p167, %p168
    %p170 = pneg %p169
    // Predicated region
    $region29: #{cam_module_forward.1} parent=5 // pred_check
      _
    $region30: #{cam_module_forward.1} parent=5 // pred_check_branch
      %172 = sbr.rel (%p169) target = $region32
    $region31: #{cam_module_forward.1} parent=5 // pred_region
      %s173 = ssub.s32 %s10, 1
      %p174 = pneg %p43
      %p175 = pneg %p40
      %p176 = scmp.lt.s32.totalorder %s19, 1
      %s177 = scalar_select %p176, %s19, 1
      %p178 = scmp.lt.s32.totalorder %s20, 0
      %s179 = scalar_select %p178, %s20, 0
      %s180 = smul.addr %s179, 2
      %s181 = smul.addr %s177, 2
      %s182 = sadd.s32 %s180, %s181
      %s183 = smul.addr %s182, 4
      %s184 = scalar_lea.vmem %s1, %s183
      %p185 = pneg %p71
      %p186 = pneg %p68
      %p187 = scmp.lt.s32.totalorder %s19, 1
      %s188 = scalar_select %p187, %s19, 1
      %s189 = smul.addr %s188, 2
      %s190 = smul.addr %s189, 4
      %s191 = scalar_lea.vmem %s2, %s190
      %p192 = pneg %p97
      %p193 = pneg %p94
      %p194 = pneg %p125
      %p195 = pneg %p122
      %p196 = scmp.lt.s32.totalorder %s19, 1
      %s197 = scalar_select %p196, %s19, 1
      %p198 = scmp.lt.s32.totalorder %s20, 0
      %s199 = scalar_select %p198, %s20, 0
      %s200 = smul.addr %s199, 2
      %s201 = smul.addr %s197, 2
      %s202 = sadd.s32 %s200, %s201
      %s203 = smul.addr %s202, 4
      %s204 = scalar_lea.vmem %s3, %s203
      %p205 = scmp.lt.s32.totalorder %s19, 1
      %s206 = scalar_select %p205, %s19, 1
      %p207 = scmp.lt.s32.totalorder %s20, 0
      %s208 = scalar_select %p207, %s20, 0
      %s209 = smul.addr %s208, 2
      %s210 = smul.addr %s206, 2
      %s211 = sadd.s32 %s209, %s210
      %s212 = smul.addr %s211, 4
      %s213 = scalar_lea.vmem %s1, %s212
      %p214 = scmp.lt.s32.totalorder %s19, 1
      %s215 = scalar_select %p214, %s19, 1
      %s216 = smul.addr %s215, 2
      %s217 = smul.addr %s216, 4
      %s218 = scalar_lea.vmem %s2, %s217
      %p219 = scmp.lt.s32.totalorder %s19, 1
      %s220 = scalar_select %p219, %s19, 1
      %p221 = scmp.lt.s32.totalorder %s20, 0
      %s222 = scalar_select %p221, %s20, 0
      %s223 = smul.addr %s222, 2
      %s224 = smul.addr %s220, 2
      %s225 = sadd.s32 %s223, %s224
      %s226 = smul.addr %s225, 4
      %s227 = scalar_lea.vmem %s3, %s226
      %v228 = vld [vmem:[%s213] sm:$0xff]
      %v229 = vld [vmem:[%s218] sm:$0xff]
      %v231 = vcombine.high %v228, %v228
      %v234 = vcombine.high %v229, %v229
      %236 = vmatprep.subr.mxu0 0.0
      %237 = vmatpush1.xpose.msra.mxu0 0.0
      %238 = vmatprep.subr.mxu0 0.0
      %239 = vmatpush1.xpose.msra.mxu0 0.0
      %240 = vmatprep.subr.mxu0 0.0
      %241 = vmatpush1.xpose.msra.mxu0 0.0
      %242 = vmatprep.subr.mxu0 0.0
      %243 = vmatpush1.xpose.msra.mxu0 0.0
      %244 = vmatprep.subr.mxu0 0.0
      %245 = vmatpush1.xpose.msra.mxu0 0.0
      %246 = vmatprep.subr.mxu0 0.0
      %247 = vmatpush1.xpose.msra.mxu0 0.0
      %248 = vmatprep.subr.mxu0 0.0
      %249 = vmatpush1.xpose.msra.mxu0 0.0
      %250 = vmatprep.subr.mxu0 0.0
      %251 = vmatpush1.xpose.msra.mxu0 0.0
      %252 = vmatprep.subr.mxu0 0.0
      %253 = vmatpush1.xpose.msra.mxu0 0.0
      %254 = vmatprep.subr.mxu0 0.0
      %255 = vmatpush1.xpose.msra.mxu0 0.0
      %256 = vmatprep.subr.mxu0 0.0
      %257 = vmatpush1.xpose.msra.mxu0 0.0
      %258 = vmatprep.subr.mxu0 0.0
      %259 = vmatpush1.xpose.msra.mxu0 0.0
      %260 = vmatprep.subr.mxu0 0.0
      %261 = vmatpush1.xpose.msra.mxu0 0.0
      %262 = vmatprep.subr.mxu0 0.0
      %263 = vmatpush1.xpose.msra.mxu0 0.0
      %264 = vmatprep.subr.mxu0 0.0
      %265 = vmatpush1.xpose.msra.mxu0 0.0
      %266 = vmatprep.subr.mxu0 %v234
      %267 = vmatpush1.xpose.msra.mxu0 %v229
      %268 = vmatprep.subr.mxu0 0.0
      %269 = vmatpush2.xpose.msra.mxu0 0.0
      %270 = vmatprep.subr.mxu0 0.0
      %271 = vmatpush2.xpose.msra.mxu0 0.0
      %272 = vmatprep.subr.mxu0 0.0
      %273 = vmatpush2.xpose.msra.mxu0 0.0
      %274 = vmatprep.subr.mxu0 0.0
      %275 = vmatpush2.xpose.msra.mxu0 0.0
      %276 = vmatprep.subr.mxu0 0.0
      %277 = vmatpush2.xpose.msra.mxu0 0.0
      %278 = vmatprep.subr.mxu0 0.0
      %279 = vmatpush2.xpose.msra.mxu0 0.0
      %280 = vmatprep.subr.mxu0 0.0
      %281 = vmatpush2.xpose.msra.mxu0 0.0
      %282 = vmatprep.subr.mxu0 0.0
      %283 = vmatpush2.xpose.msra.mxu0 0.0
      %284 = vmatprep.subr.mxu0 0.0
      %285 = vmatpush2.xpose.msra.mxu0 0.0
      %286 = vmatprep.subr.mxu0 0.0
      %287 = vmatpush2.xpose.msra.mxu0 0.0
      %288 = vmatprep.subr.mxu0 0.0
      %289 = vmatpush2.xpose.msra.mxu0 0.0
      %290 = vmatprep.subr.mxu0 0.0
      %291 = vmatpush2.xpose.msra.mxu0 0.0
      %292 = vmatprep.subr.mxu0 0.0
      %293 = vmatpush2.xpose.msra.mxu0 0.0
      %294 = vmatprep.subr.mxu0 0.0
      %295 = vmatpush2.xpose.msra.mxu0 0.0
      %296 = vmatprep.subr.mxu0 0.0
      %297 = vmatpush2.xpose.msra.mxu0 0.0
      %298 = vmatprep.subr.mxu0 0.0
      %299 = vmatpush2.xpose.msra.mxu0 0.0
      %300 = vmatprep.mubr.f32.mxu0 %v231
      %301 = vmatmul.mubr.f32.gmra.mxu0 %v228
      %v302 = vpop.f32.mrf.mxu0
      %v303 = vadd.f32 0.0, %v302
      %v304 = vpop.f32.mrf.mxu0
      %305 = vdwg.mxu0
      %vm306 = vcmask 27648
      %v307 = vsel %vm306, %v303, inf
      %308 = vmin.xlane.f32.xlu0 %v307
      %v309 = vpop.xlane.xlu0 %308
      %v310 = vsub.f32 %v309, %v303
      %v311 = vmul.f32 %v310, 1.442695
      %v312 = vpow.pop %v311
      %v313 = vsel %vm306, %v312, 0.0
      %314 = vadd.xlane.f32.xlu0 %v313
      %v315 = vpop.xlane.xlu0 %314
      %v316 = vrcp.pop %v315
      %v317 = vmul.f32 %v315, %v316
      %v318 = vsub.f32 2.0, %v317
      %v319 = vmul.f32 %v316, %v318
      %vm320 = vcmask 31744
      %v322 = vsel %vm320, %v312, 0
      %vm324 = vcmask 1043456
      %v325 = vsel %vm324, %v229, 0
      %v327 = vsel %vm324, %v234, 0
      %329 = vmatprep.subr.mxu0 0.0
      %330 = vmatpush1.msra.mxu0 0.0
      %331 = vmatprep.subr.mxu0 0.0
      %332 = vmatpush1.msra.mxu0 0.0
      %333 = vmatprep.subr.mxu0 0.0
      %334 = vmatpush1.msra.mxu0 0.0
      %335 = vmatprep.subr.mxu0 0.0
      %336 = vmatpush1.msra.mxu0 0.0
      %337 = vmatprep.subr.mxu0 0.0
      %338 = vmatpush1.msra.mxu0 0.0
      %339 = vmatprep.subr.mxu0 0.0
      %340 = vmatpush1.msra.mxu0 0.0
      %341 = vmatprep.subr.mxu0 0.0
      %342 = vmatpush1.msra.mxu0 0.0
      %343 = vmatprep.subr.mxu0 0.0
      %344 = vmatpush1.msra.mxu0 0.0
      %345 = vmatprep.subr.mxu0 0.0
      %346 = vmatpush1.msra.mxu0 0.0
      %347 = vmatprep.subr.mxu0 0.0
      %348 = vmatpush1.msra.mxu0 0.0
      %349 = vmatprep.subr.mxu0 0.0
      %350 = vmatpush1.msra.mxu0 0.0
      %351 = vmatprep.subr.mxu0 0.0
      %352 = vmatpush1.msra.mxu0 0.0
      %353 = vmatprep.subr.mxu0 0.0
      %354 = vmatpush1.msra.mxu0 0.0
      %355 = vmatprep.subr.mxu0 0.0
      %356 = vmatpush1.msra.mxu0 0.0
      %357 = vmatprep.subr.mxu0 0.0
      %358 = vmatpush1.msra.mxu0 0.0
      %359 = vmatprep.subr.mxu0 %v327
      %360 = vmatpush1.msra.mxu0 %v325
      %361 = vmatprep.subr.mxu0 0.0
      %362 = vmatpush2.msra.mxu0 0.0
      %363 = vmatprep.subr.mxu0 0.0
      %364 = vmatpush2.msra.mxu0 0.0
      %365 = vmatprep.subr.mxu0 0.0
      %366 = vmatpush2.msra.mxu0 0.0
      %367 = vmatprep.subr.mxu0 0.0
      %368 = vmatpush2.msra.mxu0 0.0
      %369 = vmatprep.subr.mxu0 0.0
      %370 = vmatpush2.msra.mxu0 0.0
      %371 = vmatprep.subr.mxu0 0.0
      %372 = vmatpush2.msra.mxu0 0.0
      %373 = vmatprep.subr.mxu0 0.0
      %374 = vmatpush2.msra.mxu0 0.0
      %375 = vmatprep.subr.mxu0 0.0
      %376 = vmatpush2.msra.mxu0 0.0
      %377 = vmatprep.subr.mxu0 0.0
      %378 = vmatpush2.msra.mxu0 0.0
      %379 = vmatprep.subr.mxu0 0.0
      %380 = vmatpush2.msra.mxu0 0.0
      %381 = vmatprep.subr.mxu0 0.0
      %382 = vmatpush2.msra.mxu0 0.0
      %383 = vmatprep.subr.mxu0 0.0
      %384 = vmatpush2.msra.mxu0 0.0
      %385 = vmatprep.subr.mxu0 0.0
      %386 = vmatpush2.msra.mxu0 0.0
      %387 = vmatprep.subr.mxu0 0.0
      %388 = vmatpush2.msra.mxu0 0.0
      %389 = vmatprep.subr.mxu0 0.0
      %390 = vmatpush2.msra.mxu0 0.0
      %391 = vmatprep.subr.mxu0 0.0
      %392 = vmatpush2.msra.mxu0 0.0
      %393 = vmatprep.mubr.f32.mxu0 0.0
      %394 = vmatmul.mubr.f32.gmra.mxu0 %v322
      %v395 = vpop.f32.mrf.mxu0
      %v396 = vadd.f32 0.0, %v395
      %v397 = vpop.f32.mrf.mxu0
      %v398 = vadd.f32 0.0, %v397
      %399 = vdwg.mxu0
      %s400 = sld [smem:[#allocation2]]
      %v401 = vmul.f32 %v396, %v319
      %v402 = vmul.f32 %v398, %v319
      %v403 = vstv %s400
      %v404 = vmul.f32 %v403, %v401
      %v405 = vmul.f32 %v403, %v402
      %v406 = vadd.f32 %v404, %v228
      %v407 = vadd.f32 %v405, %v231
      %v410 = vcombine.low %v406, %v407
      %412 = vst [vmem:[%s227] sm:$0xff] %v410
      %p413 = scmp.lt.s32.totalorder %s19, 1
      %s414 = scalar_select %p413, %s19, 1
      %p415 = scmp.lt.s32.totalorder %s20, 0
      %s416 = scalar_select %p415, %s20, 0
      %s417 = smul.addr %s416, 2
      %s418 = smul.addr %s414, 2
      %s419 = sadd.s32 %s417, %s418
      %s420 = smul.addr %s419, 4
      %s421 = scalar_lea.vmem %s3, %s420
      // Predicated region
      $region33: #{cam_module_forward.1} parent=31 // pred_check
        %p422 = pneg %p122
      $region34: #{cam_module_forward.1} parent=31 // pred_check_branch
        %424 = sbr.rel (%p422) target = $region36
      $region35: #{cam_module_forward.1} parent=31 // pred_region
        _
      $region36: #{cam_module_forward.1} parent=31 // pred_fallthru
        _
    $region32: #{cam_module_forward.1} parent=5 // pred_fallthru
      _
    %p425 = scmp.le.s32.totalorder 2, %s10
    // Predicated region
    $region37: #{cam_module_forward.1} parent=5 // pred_check
      %p426 = pneg %p425
    $region38: #{cam_module_forward.1} parent=5 // pred_check_branch
      %428 = sbr.rel (%p426) target = $region40
    $region39: #{cam_module_forward.1} parent=5 // pred_region
      %s429 = ssub.s32 %s10, 2
      // Predicated region
      $region41: #{cam_module_forward.1} parent=39 // pred_check
        %p430 = pneg %p128
      $region42: #{cam_module_forward.1} parent=39 // pred_check_branch
        %432 = sbr.rel (%p430) target = $region44
      $region43: #{cam_module_forward.1} parent=39 // pred_region
        %p433 = scmp.lt.s32.totalorder %s21, 1
        %s434 = scalar_select %p433, %s21, 1
        %p435 = scmp.lt.s32.totalorder %s22, 0
        %s436 = scalar_select %p435, %s22, 0
        %s437 = smul.addr %s436, 2
        %s438 = smul.addr %s434, 2
        %s439 = sadd.s32 %s437, %s438
        %s440 = smul.addr %s439, 4
        %s441 = scalar_lea.vmem %s3, %s440
      $region44: #{cam_module_forward.1} parent=39 // pred_fallthru
        _
    $region40: #{cam_module_forward.1} parent=5 // pred_fallthru
      _
  $region6: #{cam_module_forward.1} parent=0 // loop_footer
    %s14 = sadd.s32 1, %s10
  $region7: #{cam_module_forward.1} parent=0 // loop_footer_branch
    %9 = sbr.rel target = $region3
  $region8: #{cam_module_forward.1} parent=0 // loop_exit
    _

</llo_original>
